<compile_context>
chip_gen: v6e
topology: v6e:2x2x1
jax: 0.10.0
libtpu: 0.0.40
codegen_flags: <defaults>
</compile_context>

<pallas_src>
import functools

import jax
import jax.numpy as jnp
from jax.experimental import pallas as pl
from jax.experimental.pallas import tpu as pltpu

LEAKY_SLOPE = 0.01  # PyTorch nn.LeakyReLU default negative_slope
LANE = 128          # TPU lane width: feature dims padded to multiples of this
SUBLANE = 8         # f32 sublane count: batch tile must be a multiple of this


def _round_up(x, m):
    return (x + m - 1) // m * m


def _mlp_fused_kernel(*refs, num_layers):
    """refs = (x_ref, w0_ref, b0_ref, w1_ref, b1_ref, ..., o_ref).

    One grid step processes a (tm, d_in_pad) batch tile. The whole layer chain
    is unrolled with a static Python loop; intermediate activations stay in
    vregs/VMEM and never round-trip through HBM.
    """
    x_ref = refs[0]
    o_ref = refs[-1]
    param_refs = refs[1:-1]

    h = x_ref[...]  # f32 (tm, d_in_pad)
    for i in range(num_layers):
        w = param_refs[2 * i][...]       # bf16 (d_prev_pad, d_next_pad)
        b = param_refs[2 * i + 1][...]   # f32  (1, d_next_pad) -> broadcasts over rows
        # bf16 operands hit MXU peak; f32 accumulation keeps numerics tight.
        h = jnp.dot(h.astype(jnp.bfloat16), w,
                    preferred_element_type=jnp.float32) + b
        if i < num_layers - 1:
            # LeakyReLU in f32 on the VPU (v5e has no bf16 VALU).
            h = jnp.where(h > 0.0, h, LEAKY_SLOPE * h)
    o_ref[...] = h.astype(o_ref.dtype)


def init_dynamic_net_params(key, inputshape, array, outputshape):
    """Mirror DynamicNet.__init__ layer shapes with PyTorch-like default init.

    Returns f32 (W, b) pairs with W pre-transposed to (in, out), so the kernel
    computes y = x @ W + b (== nn.Linear's y = x @ W.T + b).
    """
    params = []
    dims = [inputshape] + list(array) + [outputshape]
    for i in range(len(dims) - 1):
        d_in, d_out = dims[i], dims[i + 1]
        key, kw, kb = jax.random.split(key, 3)
        bound = 1.0 / float(d_in) ** 0.5
        w = jax.random.uniform(kw, (d_in, d_out), jnp.float32, -bound, bound)
        b = jax.random.uniform(kb, (d_out,), jnp.float32, -bound, bound)
        params.append((w, b))
    return params


def prepare_params(params):
    """Pad every feature dim up to a multiple of 128 lanes; cast W to bf16.

    Zero padding preserves semantics: padded input columns multiply zero
    weight rows, padded hidden columns evaluate to 0 (LeakyReLU(0) == 0), and
    padded output columns are sliced off by the caller. Hoist this out of the
    per-call path.
    """
    prepared = []
    for w, b in params:
        d_in, d_out = w.shape
        d_in_p, d_out_p = _round_up(d_in, LANE), _round_up(d_out, LANE)
        w_p = jnp.pad(w, ((0, d_in_p - d_in), (0, d_out_p - d_out)))
        b_p = jnp.pad(b.reshape(1, -1), ((0, 0), (0, d_out_p - d_out)))
        prepared.append((w_p.astype(jnp.bfloat16), b_p.astype(jnp.float32)))
    return prepared


def dynamic_net_forward(x, prepared_params, outputshape, *, tm=128):
    """Fused DynamicNet forward in a single batch-tiled pallas_call.

    x: (B, inputshape) f32.
    prepared_params: output of prepare_params (lane-padded, bf16 weights).
    outputshape: true (unpadded) output feature count.
    """
    B, d_in = x.shape
    d_in_pad = prepared_params[0][0].shape[0]
    d_out_pad = prepared_params[-1][0].shape[1]
    num_layers = len(prepared_params)

    # Batch tile: multiple of 8 sublanes, capped at the requested tm.
    tm = max(SUBLANE, min(tm, _round_up(B, SUBLANE)))
    b_pad = _round_up(B, tm)
    grid = (b_pad // tm,)

    x_p = jnp.pad(x.astype(jnp.float32),
                  ((0, b_pad - B), (0, d_in_pad - d_in)))

    flat_inputs = [x_p]
    in_specs = [pl.BlockSpec((tm, d_in_pad), lambda i: (i, 0))]
    flops = 0
    bytes_accessed = x_p.size * 4
    param_bytes = 0
    for w, b2 in prepared_params:
        flat_inputs += [w, b2]
        # Constant index_map: same block for every grid step -> weights/biases
        # stay VMEM-resident and are fetched from HBM only once.
        # TODO(synk): on v7x (64 MiB VMEM) consider pipeline_mode=pl.Buffered(1)
        # on these specs, and switch to a per-layer (M, N, K)-tiled kernel
        # (K last + "arbitrary", f32 VMEM accumulator, TN=256) once resident
        # weights exceed ~20-25 MiB.
        in_specs.append(pl.BlockSpec(w.shape, lambda i: (0, 0)))
        in_specs.append(pl.BlockSpec(b2.shape, lambda i: (0, 0)))
        flops += 2 * b_pad * w.shape[0] * w.shape[1] + b_pad * w.shape[1]
        param_bytes += w.size * w.dtype.itemsize + b2.size * b2.dtype.itemsize
    bytes_accessed += param_bytes + b_pad * d_out_pad * 4

    # VMEM budget: resident params (+double-buffer headroom) + pipelined
    # x/out tiles + widest intermediate activation, capped at v7x's 64 MiB.
    max_width = max(w.shape[1] for w, _ in prepared_params)
    act_bytes = 2 * tm * (d_in_pad + d_out_pad) * 4
    vmem_needed = 2 * param_bytes + 2 * act_bytes + 4 * tm * max_width * 4
    vmem_limit = int(min(max(2 * vmem_needed, 32 * 2**20), 64 * 2**20))

    kernel = functools.partial(_mlp_fused_kernel, num_layers=num_layers)
    out_p = pl.pallas_call(
        kernel,
        out_shape=jax.ShapeDtypeStruct((b_pad, d_out_pad), jnp.float32),
        grid=grid,
        in_specs=in_specs,
        out_specs=pl.BlockSpec((tm, d_out_pad), lambda i: (i, 0)),
        compiler_params=pltpu.CompilerParams(
            dimension_semantics=("parallel",),  # batch tiles across v7x's 2 TCs
            vmem_limit_bytes=vmem_limit,
        ),
        cost_estimate=pl.CostEstimate(
            flops=flops, transcendentals=0, bytes_accessed=bytes_accessed),
    )(*flat_inputs)
    return out_p[:B, :outputshape]


def reference_forward_f32(x, params):
    """Pure f32 reference of the PyTorch module semantics."""
    n = len(params)
    for i, (w, b) in enumerate(params):
        x = x @ w + b
        if i < n - 1:
            x = jnp.where(x > 0.0, x, LEAKY_SLOPE * x)
    return x


def reference_forward_bf16(x, params):
    """Reference mirroring the kernel's bf16-in / f32-accumulate numerics."""
    n = len(params)
    h = x.astype(jnp.float32)
    for i, (w, b) in enumerate(params):
        h = jnp.dot(h.astype(jnp.bfloat16), w.astype(jnp.bfloat16),
                    preferred_element_type=jnp.float32) + b
        if i < n - 1:
            h = jnp.where(h > 0.0, h, LEAKY_SLOPE * h)
    return h


if __name__ == "__main__":
    key = jax.random.PRNGKey(0)
    k_in, k_params = jax.random.split(key)

    batch = 48            # not a multiple of the batch tile -> exercises row padding
    inputshape = 16
    array = [32, 64, 32]  # hidden layer sizes -> Linear + LeakyReLU each
    outputshape = 8

    x = jax.random.normal(k_in, (batch, inputshape), jnp.float32)
    params = init_dynamic_net_params(k_params, inputshape, array, outputshape)
    prepared = prepare_params(params)  # lane-padded bf16 weights (hoisted out of the call)

    out = dynamic_net_forward(x, prepared, outputshape, tm=32)  # grid of 2 batch tiles
    out = jax.block_until_ready(out)
    assert out.shape == (batch, outputshape)

    # Tight check vs. a reference that mirrors the kernel's bf16/f32 numerics.
    ref_bf16 = jax.block_until_ready(reference_forward_bf16(x, params))
    assert jnp.allclose(out, ref_bf16, atol=2e-3, rtol=2e-3), float(
        jnp.max(jnp.abs(out - ref_bf16)))

    # Loose sanity check vs. the pure-f32 PyTorch semantics (bf16 weight quant).
    ref_f32 = jax.block_until_ready(reference_forward_f32(x, params))
    assert jnp.allclose(out, ref_f32, atol=0.1, rtol=0.1)

    print("KERNEL_OK")
</pallas_src>

<mosaic_0001>
module attributes {stable_mosaic.version = 11 : i64} {
  func.func @_mlp_fused_kernel(%arg0: i32, %arg1: memref<32x128xf32, #tpu.memory_space<vmem>>, %arg2: memref<128x128xbf16, #tpu.memory_space<vmem>>, %arg3: memref<1x128xf32, #tpu.memory_space<vmem>>, %arg4: memref<128x128xbf16, #tpu.memory_space<vmem>>, %arg5: memref<1x128xf32, #tpu.memory_space<vmem>>, %arg6: memref<128x128xbf16, #tpu.memory_space<vmem>>, %arg7: memref<1x128xf32, #tpu.memory_space<vmem>>, %arg8: memref<128x128xbf16, #tpu.memory_space<vmem>>, %arg9: memref<1x128xf32, #tpu.memory_space<vmem>>, %arg10: memref<32x128xf32, #tpu.memory_space<vmem>>) attributes {dimension_semantics = [#tpu.dimension_semantics<parallel>], iteration_bounds = array<i64: 2>, scalar_prefetch = 0 : i64, scratch_operands = 0 : i64, tpu.core_type = #tpu.core_type<tc>, window_params = [{transform_indices = @transform_0, window_bounds = array<i64: 32, 128>}, {pipeline_mode = #tpu.pipeline_mode<synchronous>, transform_indices = @transform_1, window_bounds = array<i64: 128, 128>}, {pipeline_mode = #tpu.pipeline_mode<synchronous>, transform_indices = @transform_2, window_bounds = array<i64: 1, 128>}, {pipeline_mode = #tpu.pipeline_mode<synchronous>, transform_indices = @transform_3, window_bounds = array<i64: 128, 128>}, {pipeline_mode = #tpu.pipeline_mode<synchronous>, transform_indices = @transform_4, window_bounds = array<i64: 1, 128>}, {pipeline_mode = #tpu.pipeline_mode<synchronous>, transform_indices = @transform_5, window_bounds = array<i64: 128, 128>}, {pipeline_mode = #tpu.pipeline_mode<synchronous>, transform_indices = @transform_6, window_bounds = array<i64: 1, 128>}, {pipeline_mode = #tpu.pipeline_mode<synchronous>, transform_indices = @transform_7, window_bounds = array<i64: 128, 128>}, {pipeline_mode = #tpu.pipeline_mode<synchronous>, transform_indices = @transform_8, window_bounds = array<i64: 1, 128>}, {transform_indices = @transform_9, window_bounds = array<i64: 32, 128>}]} {
    %c0 = arith.constant 0 : index
    %c0_0 = arith.constant 0 : index
    %0 = vector.load %arg1[%c0, %c0_0] : memref<32x128xf32, #tpu.memory_space<vmem>>, vector<32x128xf32>
    %c0_1 = arith.constant 0 : index
    %c0_2 = arith.constant 0 : index
    %1 = vector.load %arg2[%c0_1, %c0_2] : memref<128x128xbf16, #tpu.memory_space<vmem>>, vector<128x128xbf16>
    %c0_3 = arith.constant 0 : index
    %c0_4 = arith.constant 0 : index
    %2 = vector.load %arg3[%c0_3, %c0_4] : memref<1x128xf32, #tpu.memory_space<vmem>>, vector<1x128xf32>
    %3 = arith.truncf %0 : vector<32x128xf32> to vector<32x128xbf16>
    %cst = arith.constant dense<0.000000e+00> : vector<32x128xf32>
    %4 = tpu.matmul %3, %1, %cst {dimension_numbers = #tpu.dot_dimension_numbers<[1], [0], [0], [1], [0, 0, 1, 1], [], []>} : vector<32x128xbf16>, vector<128x128xbf16>, vector<32x128xf32> -> vector<32x128xf32>
    %5 = vector.broadcast %2 : vector<1x128xf32> to vector<32x128xf32>
    %6 = arith.addf %4, %5 : vector<32x128xf32>
    %cst_5 = arith.constant 0.000000e+00 : f32
    %7 = vector.broadcast %cst_5 : f32 to vector<32x128xf32>
    %8 = arith.cmpf ogt, %6, %7 : vector<32x128xf32>
    %cst_6 = arith.constant 0.00999999977 : f32
    %9 = vector.broadcast %cst_6 : f32 to vector<32x128xf32>
    %10 = arith.mulf %9, %6 : vector<32x128xf32>
    %11 = arith.select %8, %6, %10 : vector<32x128xi1>, vector<32x128xf32>
    %c0_7 = arith.constant 0 : index
    %c0_8 = arith.constant 0 : index
    %12 = vector.load %arg4[%c0_7, %c0_8] : memref<128x128xbf16, #tpu.memory_space<vmem>>, vector<128x128xbf16>
    %c0_9 = arith.constant 0 : index
    %c0_10 = arith.constant 0 : index
    %13 = vector.load %arg5[%c0_9, %c0_10] : memref<1x128xf32, #tpu.memory_space<vmem>>, vector<1x128xf32>
    %14 = arith.truncf %11 : vector<32x128xf32> to vector<32x128xbf16>
    %cst_11 = arith.constant dense<0.000000e+00> : vector<32x128xf32>
    %15 = tpu.matmul %14, %12, %cst_11 {dimension_numbers = #tpu.dot_dimension_numbers<[1], [0], [0], [1], [0, 0, 1, 1], [], []>} : vector<32x128xbf16>, vector<128x128xbf16>, vector<32x128xf32> -> vector<32x128xf32>
    %16 = vector.broadcast %13 : vector<1x128xf32> to vector<32x128xf32>
    %17 = arith.addf %15, %16 : vector<32x128xf32>
    %cst_12 = arith.constant 0.000000e+00 : f32
    %18 = vector.broadcast %cst_12 : f32 to vector<32x128xf32>
    %19 = arith.cmpf ogt, %17, %18 : vector<32x128xf32>
    %cst_13 = arith.constant 0.00999999977 : f32
    %20 = vector.broadcast %cst_13 : f32 to vector<32x128xf32>
    %21 = arith.mulf %20, %17 : vector<32x128xf32>
    %22 = arith.select %19, %17, %21 : vector<32x128xi1>, vector<32x128xf32>
    %c0_14 = arith.constant 0 : index
    %c0_15 = arith.constant 0 : index
    %23 = vector.load %arg6[%c0_14, %c0_15] : memref<128x128xbf16, #tpu.memory_space<vmem>>, vector<128x128xbf16>
    %c0_16 = arith.constant 0 : index
    %c0_17 = arith.constant 0 : index
    %24 = vector.load %arg7[%c0_16, %c0_17] : memref<1x128xf32, #tpu.memory_space<vmem>>, vector<1x128xf32>
    %25 = arith.truncf %22 : vector<32x128xf32> to vector<32x128xbf16>
    %cst_18 = arith.constant dense<0.000000e+00> : vector<32x128xf32>
    %26 = tpu.matmul %25, %23, %cst_18 {dimension_numbers = #tpu.dot_dimension_numbers<[1], [0], [0], [1], [0, 0, 1, 1], [], []>} : vector<32x128xbf16>, vector<128x128xbf16>, vector<32x128xf32> -> vector<32x128xf32>
    %27 = vector.broadcast %24 : vector<1x128xf32> to vector<32x128xf32>
    %28 = arith.addf %26, %27 : vector<32x128xf32>
    %cst_19 = arith.constant 0.000000e+00 : f32
    %29 = vector.broadcast %cst_19 : f32 to vector<32x128xf32>
    %30 = arith.cmpf ogt, %28, %29 : vector<32x128xf32>
    %cst_20 = arith.constant 0.00999999977 : f32
    %31 = vector.broadcast %cst_20 : f32 to vector<32x128xf32>
    %32 = arith.mulf %31, %28 : vector<32x128xf32>
    %33 = arith.select %30, %28, %32 : vector<32x128xi1>, vector<32x128xf32>
    %c0_21 = arith.constant 0 : index
    %c0_22 = arith.constant 0 : index
    %34 = vector.load %arg8[%c0_21, %c0_22] : memref<128x128xbf16, #tpu.memory_space<vmem>>, vector<128x128xbf16>
    %c0_23 = arith.constant 0 : index
    %c0_24 = arith.constant 0 : index
    %35 = vector.load %arg9[%c0_23, %c0_24] : memref<1x128xf32, #tpu.memory_space<vmem>>, vector<1x128xf32>
    %36 = arith.truncf %33 : vector<32x128xf32> to vector<32x128xbf16>
    %cst_25 = arith.constant dense<0.000000e+00> : vector<32x128xf32>
    %37 = tpu.matmul %36, %34, %cst_25 {dimension_numbers = #tpu.dot_dimension_numbers<[1], [0], [0], [1], [0, 0, 1, 1], [], []>} : vector<32x128xbf16>, vector<128x128xbf16>, vector<32x128xf32> -> vector<32x128xf32>
    %38 = vector.broadcast %35 : vector<1x128xf32> to vector<32x128xf32>
    %39 = arith.addf %37, %38 : vector<32x128xf32>
    %c0_26 = arith.constant 0 : index
    %c0_27 = arith.constant 0 : index
    %40 = vector.load %arg10[%c0_26, %c0_27] : memref<32x128xf32, #tpu.memory_space<vmem>>, vector<32x128xf32>
    tpu.vector_store %arg10[%c0_26, %c0_27], %39 {strides = array<i32>} : memref<32x128xf32, #tpu.memory_space<vmem>>, vector<32x128xf32>,
    return
  }
  func.func @transform_0(%arg0: i32) -> (i32, i32) {
    %c0_i32 = arith.constant 0 : i32
    %c0_i32_0 = arith.constant 0 : i32
    return %arg0, %c0_i32 : i32, i32
  }
  func.func @transform_1(%arg0: i32) -> (i32, i32) {
    %c0_i32 = arith.constant 0 : i32
    %c0_i32_0 = arith.constant 0 : i32
    %c0_i32_1 = arith.constant 0 : i32
    return %c0_i32, %c0_i32_0 : i32, i32
  }
  func.func @transform_2(%arg0: i32) -> (i32, i32) {
    %c0_i32 = arith.constant 0 : i32
    %c0_i32_0 = arith.constant 0 : i32
    %c0_i32_1 = arith.constant 0 : i32
    return %c0_i32, %c0_i32_0 : i32, i32
  }
  func.func @transform_3(%arg0: i32) -> (i32, i32) {
    %c0_i32 = arith.constant 0 : i32
    %c0_i32_0 = arith.constant 0 : i32
    %c0_i32_1 = arith.constant 0 : i32
    return %c0_i32, %c0_i32_0 : i32, i32
  }
  func.func @transform_4(%arg0: i32) -> (i32, i32) {
    %c0_i32 = arith.constant 0 : i32
    %c0_i32_0 = arith.constant 0 : i32
    %c0_i32_1 = arith.constant 0 : i32
    return %c0_i32, %c0_i32_0 : i32, i32
  }
  func.func @transform_5(%arg0: i32) -> (i32, i32) {
    %c0_i32 = arith.constant 0 : i32
    %c0_i32_0 = arith.constant 0 : i32
    %c0_i32_1 = arith.constant 0 : i32
    return %c0_i32, %c0_i32_0 : i32, i32
  }
  func.func @transform_6(%arg0: i32) -> (i32, i32) {
    %c0_i32 = arith.constant 0 : i32
    %c0_i32_0 = arith.constant 0 : i32
    %c0_i32_1 = arith.constant 0 : i32
    return %c0_i32, %c0_i32_0 : i32, i32
  }
  func.func @transform_7(%arg0: i32) -> (i32, i32) {
    %c0_i32 = arith.constant 0 : i32
    %c0_i32_0 = arith.constant 0 : i32
    %c0_i32_1 = arith.constant 0 : i32
    return %c0_i32, %c0_i32_0 : i32, i32
  }
  func.func @transform_8(%arg0: i32) -> (i32, i32) {
    %c0_i32 = arith.constant 0 : i32
    %c0_i32_0 = arith.constant 0 : i32
    %c0_i32_1 = arith.constant 0 : i32
    return %c0_i32, %c0_i32_0 : i32, i32
  }
  func.func @transform_9(%arg0: i32) -> (i32, i32) {
    %c0_i32 = arith.constant 0 : i32
    %c0_i32_0 = arith.constant 0 : i32
    return %arg0, %c0_i32 : i32, i32
  }
}

</mosaic_0001>

<llo_original>
// kernel: tpu_custom_call.1
$region0: #{tpu_custom_call.1}
  #allocation0 [shape = 'u32[]', space=smem, size = 0x4, offset = 0x4, fixed_abs, tag = 'smem constant byte address 0x4 - core index']
  #allocation1 [shape = 'u32[144,128]{1,0:T(1,128)}', space=vmem, size = 0x12000, scoped, tag = 'internal scratch']
  %s0 = inlined_call_operand.hbm [shape: f32[64,128], index: 0, kind: input, shape index: {}]
  %s1 = inlined_call_operand.hbm [shape: bf16[128,128], index: 1, kind: input, shape index: {}]
  %s2 = inlined_call_operand.vmem [shape: f32[1,128], index: 2, kind: input, shape index: {}]
  %s3 = inlined_call_operand.hbm [shape: bf16[128,128], index: 3, kind: input, shape index: {}]
  %s4 = inlined_call_operand.vmem [shape: f32[1,128], index: 4, kind: input, shape index: {}]
  %s5 = inlined_call_operand.hbm [shape: bf16[128,128], index: 5, kind: input, shape index: {}]
  %s6 = inlined_call_operand.vmem [shape: f32[1,128], index: 6, kind: input, shape index: {}]
  %s7 = inlined_call_operand.hbm [shape: bf16[128,128], index: 7, kind: input, shape index: {}]
  %s8 = inlined_call_operand.vmem [shape: f32[1,128], index: 8, kind: input, shape index: {}]
  %s9 = inlined_call_operand.hbm [shape: f32[64,128], index: 9, kind: output, shape index: {}]
  %s10 = sld [smem:[#allocation0]]
  $region89: #{tpu_custom_call.1} parent=0
    _
  %s12 = ssub.s32 1, %s10
  %s13 = scalar_select 0, %s12, %s10
  $region1: #{tpu_custom_call.1} parent=0
    #allocation2 [shape = 'u8[32768]{0}', space=vmem, size = 0x8000, scoped, tag = 'input window, operand 0']
    #allocation3 [shape = 's32[2]{0}', space=sflag, size = 0x8, scoped, tag = 'scoped memory for tpu_custom_call.1']
    #allocation4 [shape = 's32[2]{0}', space=sflag, size = 0x8, scoped, tag = 'scoped memory for tpu_custom_call.1']
    #allocation5 [shape = 'u8[32768]{0}', space=vmem, size = 0x8000, scoped, tag = 'input window, operand 1, single buffered']
    #allocation6 [shape = 's32[1]{0}', space=sflag, size = 0x4, scoped, tag = 'scoped memory for tpu_custom_call.1']
    #allocation7 [shape = 'u8[32768]{0}', space=vmem, size = 0x8000, scoped, tag = 'input window, operand 3, single buffered']
    #allocation8 [shape = 'u8[32768]{0}', space=vmem, size = 0x8000, scoped, tag = 'input window, operand 5, single buffered']
    #allocation9 [shape = 's32[1]{0}', space=sflag, size = 0x4, scoped, tag = 'scoped memory for tpu_custom_call.1']
    #allocation10 [shape = 'u8[32768]{0}', space=vmem, size = 0x8000, scoped, tag = 'input window, operand 7, single buffered']
    #allocation11 [shape = 'u8[32768]{0}', space=vmem, size = 0x8000, scoped, tag = 'output window, operand 0']
    %14 = vsyncpa [#allocation3], 0
    %s15 = scalar_lea.sflag [#allocation3], 1
    %16 = vsyncpa %s15, 0
    %17 = vsyncpa [#allocation6], 0
    %18 = vsyncpa [#allocation9], 0
    %19 = vsyncpa [#allocation4], 0
    %s20 = scalar_lea.sflag [#allocation4], 1
    %21 = vsyncpa %s20, 0
    loop: start=0, step=1, limit=4
    $region2: #{tpu_custom_call.1} parent=1 // loop_pre_header
      _
    $region3: #{tpu_custom_call.1} parent=1 // loop_header
      %s23 = sphi 0, %s27
      %p24 = scmp.ge.s32.totalorder %s23, 4
      %s33 = sphi 0, %s35
      %s36 = sphi 0, %s33
      %s37 = sphi 0, %s36
      %s53 = sphi 0, %s37
      %s57 = sphi 0, %s57
      %s59 = sphi 0, %s57
      %s60 = sphi 0, %s59
      %s74 = sphi 0, %s60
      %s78 = sphi 0, %s78
      %s80 = sphi 0, %s78
      %s81 = sphi 0, %s80
      %s95 = sphi 0, %s81
      %s99 = sphi 0, %s99
      %s101 = sphi 0, %s99
      %s102 = sphi 0, %s101
      %s116 = sphi 0, %s102
      %s120 = sphi 0, %s120
      %s122 = sphi 0, %s120
      %s123 = sphi 0, %s122
      %s137 = sphi 0, %s123
      %s141 = sphi 0, %s141
      %s143 = sphi 0, %s141
      %s144 = sphi 0, %s143
      %s158 = sphi 0, %s144
      %s162 = sphi 0, %s162
      %s164 = sphi 0, %s162
      %s165 = sphi 0, %s164
      %s179 = sphi 0, %s165
      %s183 = sphi 0, %s183
      %s185 = sphi 0, %s183
      %s186 = sphi 0, %s185
      %s200 = sphi 0, %s186
      %s204 = sphi 0, %s204
      %s206 = sphi 0, %s204
      %s207 = sphi 0, %s206
      %s221 = sphi 0, %s207
      %s227 = sphi 0, %s229
      %s230 = sphi 0, %s227
      %s231 = sphi 0, %s230
      %s247 = sphi 0, %s231
    $region4: #{tpu_custom_call.1} parent=1 // loop_header_branch
      %26 = sbr.rel (%p24) target = $region8
    $region5: #{tpu_custom_call.1} parent=1 // loop_body
      %s28 = ssub.s32 %s23, 1
      %s29 = ssub.s32 %s23, 2
      %s30 = sadd.s32 %s23, 1
      %s31 = ssub.s32 %s23, %s30
      %p32 = scmp.eq.s32.totalorder %s31, 0
      %s34 = sadd.s32 %s33, 1
      %s35 = scalar_select %p32, %s33, %s34
      %p38 = pneg %p32
      %p39 = scmp.eq.s32.totalorder %s23, 1
      %p40 = por %p38, %p39
      %p41 = scmp.ne.s32.totalorder %s33, %s36
      %p42 = scmp.eq.s32.totalorder %s23, 0
      %p43 = por %p41, %p42
      %p44 = scmp.ne.s32.totalorder %s33, %s36
      %p45 = scmp.eq.s32.totalorder %s28, 1
      %p46 = por %p44, %p45
      %p47 = scmp.ne.s32.totalorder %s36, %s37
      %p48 = scmp.eq.s32.totalorder %s28, 0
      %p49 = por %p47, %p48
      %p50 = scmp.ne.s32.totalorder %s36, %s37
      %p51 = scmp.eq.s32.totalorder %s29, 1
      %p52 = por %p50, %p51
      %p54 = scmp.ne.s32.totalorder %s37, %s53
      %p55 = scmp.eq.s32.totalorder %s29, 0
      %p56 = por %p54, %p55
      %s58 = sadd.s32 %s57, 1
      %p61 = scmp.eq.s32.totalorder %s23, 1
      %p62 = scmp.ne.s32.totalorder %s57, %s59
      %p63 = scmp.eq.s32.totalorder %s23, 0
      %p64 = por %p62, %p63
      %p65 = scmp.ne.s32.totalorder %s57, %s59
      %p66 = scmp.eq.s32.totalorder %s28, 1
      %p67 = por %p65, %p66
      %p68 = scmp.ne.s32.totalorder %s59, %s60
      %p69 = scmp.eq.s32.totalorder %s28, 0
      %p70 = por %p68, %p69
      %p71 = scmp.ne.s32.totalorder %s59, %s60
      %p72 = scmp.eq.s32.totalorder %s29, 1
      %p73 = por %p71, %p72
      %p75 = scmp.ne.s32.totalorder %s60, %s74
      %p76 = scmp.eq.s32.totalorder %s29, 0
      %p77 = por %p75, %p76
      %s79 = sadd.s32 %s78, 1
      %p82 = scmp.eq.s32.totalorder %s23, 1
      %p83 = scmp.ne.s32.totalorder %s78, %s80
      %p84 = scmp.eq.s32.totalorder %s23, 0
      %p85 = por %p83, %p84
      %p86 = scmp.ne.s32.totalorder %s78, %s80
      %p87 = scmp.eq.s32.totalorder %s28, 1
      %p88 = por %p86, %p87
      %p89 = scmp.ne.s32.totalorder %s80, %s81
      %p90 = scmp.eq.s32.totalorder %s28, 0
      %p91 = por %p89, %p90
      %p92 = scmp.ne.s32.totalorder %s80, %s81
      %p93 = scmp.eq.s32.totalorder %s29, 1
      %p94 = por %p92, %p93
      %p96 = scmp.ne.s32.totalorder %s81, %s95
      %p97 = scmp.eq.s32.totalorder %s29, 0
      %p98 = por %p96, %p97
      %s100 = sadd.s32 %s99, 1
      %p103 = scmp.eq.s32.totalorder %s23, 1
      %p104 = scmp.ne.s32.totalorder %s99, %s101
      %p105 = scmp.eq.s32.totalorder %s23, 0
      %p106 = por %p104, %p105
      %p107 = scmp.ne.s32.totalorder %s99, %s101
      %p108 = scmp.eq.s32.totalorder %s28, 1
      %p109 = por %p107, %p108
      %p110 = scmp.ne.s32.totalorder %s101, %s102
      %p111 = scmp.eq.s32.totalorder %s28, 0
      %p112 = por %p110, %p111
      %p113 = scmp.ne.s32.totalorder %s101, %s102
      %p114 = scmp.eq.s32.totalorder %s29, 1
      %p115 = por %p113, %p114
      %p117 = scmp.ne.s32.totalorder %s102, %s116
      %p118 = scmp.eq.s32.totalorder %s29, 0
      %p119 = por %p117, %p118
      %s121 = sadd.s32 %s120, 1
      %p124 = scmp.eq.s32.totalorder %s23, 1
      %p125 = scmp.ne.s32.totalorder %s120, %s122
      %p126 = scmp.eq.s32.totalorder %s23, 0
      %p127 = por %p125, %p126
      %p128 = scmp.ne.s32.totalorder %s120, %s122
      %p129 = scmp.eq.s32.totalorder %s28, 1
      %p130 = por %p128, %p129
      %p131 = scmp.ne.s32.totalorder %s122, %s123
      %p132 = scmp.eq.s32.totalorder %s28, 0
      %p133 = por %p131, %p132
      %p134 = scmp.ne.s32.totalorder %s122, %s123
      %p135 = scmp.eq.s32.totalorder %s29, 1
      %p136 = por %p134, %p135
      %p138 = scmp.ne.s32.totalorder %s123, %s137
      %p139 = scmp.eq.s32.totalorder %s29, 0
      %p140 = por %p138, %p139
      %s142 = sadd.s32 %s141, 1
      %p145 = scmp.eq.s32.totalorder %s23, 1
      %p146 = scmp.ne.s32.totalorder %s141, %s143
      %p147 = scmp.eq.s32.totalorder %s23, 0
      %p148 = por %p146, %p147
      %p149 = scmp.ne.s32.totalorder %s141, %s143
      %p150 = scmp.eq.s32.totalorder %s28, 1
      %p151 = por %p149, %p150
      %p152 = scmp.ne.s32.totalorder %s143, %s144
      %p153 = scmp.eq.s32.totalorder %s28, 0
      %p154 = por %p152, %p153
      %p155 = scmp.ne.s32.totalorder %s143, %s144
      %p156 = scmp.eq.s32.totalorder %s29, 1
      %p157 = por %p155, %p156
      %p159 = scmp.ne.s32.totalorder %s144, %s158
      %p160 = scmp.eq.s32.totalorder %s29, 0
      %p161 = por %p159, %p160
      %s163 = sadd.s32 %s162, 1
      %p166 = scmp.eq.s32.totalorder %s23, 1
      %p167 = scmp.ne.s32.totalorder %s162, %s164
      %p168 = scmp.eq.s32.totalorder %s23, 0
      %p169 = por %p167, %p168
      %p170 = scmp.ne.s32.totalorder %s162, %s164
      %p171 = scmp.eq.s32.totalorder %s28, 1
      %p172 = por %p170, %p171
      %p173 = scmp.ne.s32.totalorder %s164, %s165
      %p174 = scmp.eq.s32.totalorder %s28, 0
      %p175 = por %p173, %p174
      %p176 = scmp.ne.s32.totalorder %s164, %s165
      %p177 = scmp.eq.s32.totalorder %s29, 1
      %p178 = por %p176, %p177
      %p180 = scmp.ne.s32.totalorder %s165, %s179
      %p181 = scmp.eq.s32.totalorder %s29, 0
      %p182 = por %p180, %p181
      %s184 = sadd.s32 %s183, 1
      %p187 = scmp.eq.s32.totalorder %s23, 1
      %p188 = scmp.ne.s32.totalorder %s183, %s185
      %p189 = scmp.eq.s32.totalorder %s23, 0
      %p190 = por %p188, %p189
      %p191 = scmp.ne.s32.totalorder %s183, %s185
      %p192 = scmp.eq.s32.totalorder %s28, 1
      %p193 = por %p191, %p192
      %p194 = scmp.ne.s32.totalorder %s185, %s186
      %p195 = scmp.eq.s32.totalorder %s28, 0
      %p196 = por %p194, %p195
      %p197 = scmp.ne.s32.totalorder %s185, %s186
      %p198 = scmp.eq.s32.totalorder %s29, 1
      %p199 = por %p197, %p198
      %p201 = scmp.ne.s32.totalorder %s186, %s200
      %p202 = scmp.eq.s32.totalorder %s29, 0
      %p203 = por %p201, %p202
      %s205 = sadd.s32 %s204, 1
      %p208 = scmp.eq.s32.totalorder %s23, 1
      %p209 = scmp.ne.s32.totalorder %s204, %s206
      %p210 = scmp.eq.s32.totalorder %s23, 0
      %p211 = por %p209, %p210
      %p212 = scmp.ne.s32.totalorder %s204, %s206
      %p213 = scmp.eq.s32.totalorder %s28, 1
      %p214 = por %p212, %p213
      %p215 = scmp.ne.s32.totalorder %s206, %s207
      %p216 = scmp.eq.s32.totalorder %s28, 0
      %p217 = por %p215, %p216
      %p218 = scmp.ne.s32.totalorder %s206, %s207
      %p219 = scmp.eq.s32.totalorder %s29, 1
      %p220 = por %p218, %p219
      %p222 = scmp.ne.s32.totalorder %s207, %s221
      %p223 = scmp.eq.s32.totalorder %s29, 0
      %p224 = por %p222, %p223
      %s225 = ssub.s32 %s23, %s30
      %p226 = scmp.eq.s32.totalorder %s225, 0
      %s228 = sadd.s32 %s227, 1
      %s229 = scalar_select %p226, %s227, %s228
      %p232 = pneg %p226
      %p233 = scmp.eq.s32.totalorder %s23, 1
      %p234 = por %p232, %p233
      %p235 = scmp.ne.s32.totalorder %s227, %s230
      %p236 = scmp.eq.s32.totalorder %s23, 0
      %p237 = por %p235, %p236
      %p238 = scmp.ne.s32.totalorder %s227, %s230
      %p239 = scmp.eq.s32.totalorder %s28, 1
      %p240 = por %p238, %p239
      %p241 = scmp.ne.s32.totalorder %s230, %s231
      %p242 = scmp.eq.s32.totalorder %s28, 0
      %p243 = por %p241, %p242
      %p244 = scmp.ne.s32.totalorder %s230, %s231
      %p245 = scmp.eq.s32.totalorder %s29, 1
      %p246 = por %p244, %p245
      %p248 = scmp.ne.s32.totalorder %s231, %s247
      %p249 = scmp.eq.s32.totalorder %s29, 0
      %p250 = por %p248, %p249
      %p251 = scmp.le.s32.totalorder 1, %s23
      %p252 = scmp.lt.s32.totalorder %s23, 3
      %p253 = pnand %p251, %p252
      %p254 = pneg %p253
      // Predicated region
      $region9: #{tpu_custom_call.1} parent=5 // pred_check
        _
      $region10: #{tpu_custom_call.1} parent=5 // pred_check_branch
        %256 = sbr.rel (%p253) target = $region12
      $region11: #{tpu_custom_call.1} parent=5 // pred_region
        %s257 = ssub.s32 %s23, 1
        // Predicated region
        $region13: #{tpu_custom_call.1} parent=11 // pred_check
          %p258 = pneg %p70
        $region14: #{tpu_custom_call.1} parent=11 // pred_check_branch
          %260 = sbr.rel (%p258) target = $region16
        $region15: #{tpu_custom_call.1} parent=11 // pred_region
          %s262 = ssub.s32 1024, 1024
          %263 = vsyncadd [#allocation6], %s262
          %s264 = sshll.u32 [#allocation5], 4
          %s265 = int_to_ptr.vmem [resolvable:$true] %s264
          %270 = dma.hbm_to_vmem [thread:$0]  %s1, 1024, %s265, [#allocation6], 64, 64, 4
        $region16: #{tpu_custom_call.1} parent=11 // pred_fallthru
          _
        // Predicated region
        $region17: #{tpu_custom_call.1} parent=11 // pred_check
          %p271 = pneg %p91
        $region18: #{tpu_custom_call.1} parent=11 // pred_check_branch
          %273 = sbr.rel (%p271) target = $region20
        $region19: #{tpu_custom_call.1} parent=11 // pred_region
          _
        $region20: #{tpu_custom_call.1} parent=11 // pred_fallthru
          _
        // Predicated region
        $region21: #{tpu_custom_call.1} parent=11 // pred_check
          %p274 = pneg %p112
        $region22: #{tpu_custom_call.1} parent=11 // pred_check_branch
          %276 = sbr.rel (%p274) target = $region24
        $region23: #{tpu_custom_call.1} parent=11 // pred_region
          %s278 = ssub.s32 1024, 1024
          %279 = vsyncadd [#allocation6], %s278
          %s280 = sshll.u32 [#allocation7], 4
          %s281 = int_to_ptr.vmem [resolvable:$true] %s280
          %286 = dma.hbm_to_vmem [thread:$0]  %s3, 1024, %s281, [#allocation6], 64, 64, 4
        $region24: #{tpu_custom_call.1} parent=11 // pred_fallthru
          _
        // Predicated region
        $region25: #{tpu_custom_call.1} parent=11 // pred_check
          %p287 = pneg %p133
        $region26: #{tpu_custom_call.1} parent=11 // pred_check_branch
          %289 = sbr.rel (%p287) target = $region28
        $region27: #{tpu_custom_call.1} parent=11 // pred_region
          _
        $region28: #{tpu_custom_call.1} parent=11 // pred_fallthru
          _
        // Predicated region
        $region29: #{tpu_custom_call.1} parent=11 // pred_check
          %p290 = pneg %p154
        $region30: #{tpu_custom_call.1} parent=11 // pred_check_branch
          %292 = sbr.rel (%p290) target = $region32
        $region31: #{tpu_custom_call.1} parent=11 // pred_region
          %s294 = ssub.s32 1024, 1024
          %295 = vsyncadd [#allocation9], %s294
          %s296 = sshll.u32 [#allocation8], 4
          %s297 = int_to_ptr.vmem [resolvable:$true] %s296
          %302 = dma.hbm_to_vmem [thread:$0]  %s5, 1024, %s297, [#allocation9], 64, 64, 4
        $region32: #{tpu_custom_call.1} parent=11 // pred_fallthru
          _
        // Predicated region
        $region33: #{tpu_custom_call.1} parent=11 // pred_check
          %p303 = pneg %p175
        $region34: #{tpu_custom_call.1} parent=11 // pred_check_branch
          %305 = sbr.rel (%p303) target = $region36
        $region35: #{tpu_custom_call.1} parent=11 // pred_region
          _
        $region36: #{tpu_custom_call.1} parent=11 // pred_fallthru
          _
        // Predicated region
        $region37: #{tpu_custom_call.1} parent=11 // pred_check
          %p306 = pneg %p196
        $region38: #{tpu_custom_call.1} parent=11 // pred_check_branch
          %308 = sbr.rel (%p306) target = $region40
        $region39: #{tpu_custom_call.1} parent=11 // pred_region
          %s310 = ssub.s32 1024, 1024
          %311 = vsyncadd [#allocation9], %s310
          %s312 = sshll.u32 [#allocation10], 4
          %s313 = int_to_ptr.vmem [resolvable:$true] %s312
          %318 = dma.hbm_to_vmem [thread:$0]  %s7, 1024, %s313, [#allocation9], 64, 64, 4
        $region40: #{tpu_custom_call.1} parent=11 // pred_fallthru
          _
        // Predicated region
        $region41: #{tpu_custom_call.1} parent=11 // pred_check
          %p319 = pneg %p217
        $region42: #{tpu_custom_call.1} parent=11 // pred_check_branch
          %321 = sbr.rel (%p319) target = $region44
        $region43: #{tpu_custom_call.1} parent=11 // pred_region
          _
        $region44: #{tpu_custom_call.1} parent=11 // pred_fallthru
          _
      $region12: #{tpu_custom_call.1} parent=5 // pred_fallthru
        _
      %p322 = scmp.lt.s32.totalorder %s23, 2
      // Predicated region
      $region45: #{tpu_custom_call.1} parent=5 // pred_check
        %p323 = pneg %p322
      $region46: #{tpu_custom_call.1} parent=5 // pred_check_branch
        %325 = sbr.rel (%p323) target = $region48
      $region47: #{tpu_custom_call.1} parent=5 // pred_region
        // Predicated region
        $region49: #{tpu_custom_call.1} parent=47 // pred_check
          %p326 = pneg %p43
        $region50: #{tpu_custom_call.1} parent=47 // pred_check_branch
          %328 = sbr.rel (%p326) target = $region52
        $region51: #{tpu_custom_call.1} parent=47 // pred_region
          %s329 = sand.u32 %s33, 1
          %s330 = scalar_lea.sflag [#allocation3], %s329
          %s331 = sand.u32 %s33, 1
          %s332 = smul.addr %s331, 32
          %s333 = scalar_lea.vmem [#allocation2], %s332
          %s334 = smul.u32 4, %s23
          %s336 = ssub.s32 512, 512
          %337 = vsyncadd %s330, %s336
          %s338 = smul.addr %s334, 128
          %s339 = scalar_lea.hbm %s0, %s338
          %s340 = sshll.u32 %s333, 4
          %s341 = int_to_ptr.vmem [resolvable:$true] %s340
          %346 = dma.hbm_to_vmem [thread:$0]  %s339, 512, %s341, %s330, 128, 128, 8
        $region52: #{tpu_custom_call.1} parent=47 // pred_fallthru
          _
      $region48: #{tpu_custom_call.1} parent=5 // pred_fallthru
        _
      %p347 = scmp.le.s32.totalorder 1, %s23
      %p348 = scmp.lt.s32.totalorder %s23, 3
      %p349 = pnand %p347, %p348
      %p350 = pneg %p349
      // Predicated region
      $region53: #{tpu_custom_call.1} parent=5 // pred_check
        _
      $region54: #{tpu_custom_call.1} parent=5 // pred_check_branch
        %352 = sbr.rel (%p349) target = $region56
      $region55: #{tpu_custom_call.1} parent=5 // pred_region
        %s353 = ssub.s32 %s23, 1
        %s354 = sand.u32 %s36, 1
        %s355 = scalar_lea.sflag [#allocation3], %s354
        %s356 = sand.u32 %s36, 1
        %s357 = smul.addr %s356, 32
        %s358 = scalar_lea.vmem [#allocation2], %s357
        // Predicated region
        $region57: #{tpu_custom_call.1} parent=55 // pred_check
          %p359 = pneg %p49
        $region58: #{tpu_custom_call.1} parent=55 // pred_check_branch
          %361 = sbr.rel (%p359) target = $region60
        $region59: #{tpu_custom_call.1} parent=55 // pred_region
          %362 = dma.done %s355, 512
        $region60: #{tpu_custom_call.1} parent=55 // pred_fallthru
          _
        // Predicated region
        $region61: #{tpu_custom_call.1} parent=55 // pred_check
          %p363 = pneg %p70
        $region62: #{tpu_custom_call.1} parent=55 // pred_check_branch
          %365 = sbr.rel (%p363) target = $region64
        $region63: #{tpu_custom_call.1} parent=55 // pred_region
          %366 = dma.done [#allocation6], 1024
        $region64: #{tpu_custom_call.1} parent=55 // pred_fallthru
          _
        // Predicated region
        $region65: #{tpu_custom_call.1} parent=55 // pred_check
          %p367 = pneg %p112
        $region66: #{tpu_custom_call.1} parent=55 // pred_check_branch
          %369 = sbr.rel (%p367) target = $region68
        $region67: #{tpu_custom_call.1} parent=55 // pred_region
          %370 = dma.done [#allocation6], 1024
        $region68: #{tpu_custom_call.1} parent=55 // pred_fallthru
          _
        // Predicated region
        $region69: #{tpu_custom_call.1} parent=55 // pred_check
          %p371 = pneg %p154
        $region70: #{tpu_custom_call.1} parent=55 // pred_check_branch
          %373 = sbr.rel (%p371) target = $region72
        $region71: #{tpu_custom_call.1} parent=55 // pred_region
          %374 = dma.done [#allocation9], 1024
        $region72: #{tpu_custom_call.1} parent=55 // pred_fallthru
          _
        // Predicated region
        $region73: #{tpu_custom_call.1} parent=55 // pred_check
          %p375 = pneg %p196
        $region74: #{tpu_custom_call.1} parent=55 // pred_check_branch
          %377 = sbr.rel (%p375) target = $region76
        $region75: #{tpu_custom_call.1} parent=55 // pred_region
          %378 = dma.done [#allocation9], 1024
        $region76: #{tpu_custom_call.1} parent=55 // pred_fallthru
          _
        %s379 = sand.u32 %s36, 1
        %s380 = scalar_lea.sflag [#allocation3], %s379
        %s381 = sand.u32 %s36, 1
        %s382 = smul.addr %s381, 32
        %s383 = scalar_lea.vmem [#allocation2], %s382
        %p384 = pneg %p49
        %p385 = pneg %p46
        %p386 = pneg %p70
        %p387 = pneg %p67
        %p388 = pneg %p91
        %p389 = pneg %p88
        %p390 = pneg %p112
        %p391 = pneg %p109
        %p392 = pneg %p133
        %p393 = pneg %p130
        %p394 = pneg %p154
        %p395 = pneg %p151
        %p396 = pneg %p175
        %p397 = pneg %p172
        %p398 = pneg %p196
        %p399 = pneg %p193
        %p400 = pneg %p217
        %p401 = pneg %p214
        %p402 = pneg %p243
        %p403 = pneg %p240
        %s404 = sand.u32 %s230, 1
        %s405 = scalar_lea.sflag [#allocation4], %s404
        %s406 = sand.u32 %s230, 1
        %s407 = smul.addr %s406, 32
        %s408 = scalar_lea.vmem [#allocation11], %s407
        %s409 = smul.u32 4, %s28
        %s410 = smul.u32 4, %s28
        %v412 = vld [vmem:[%s358] sm:$0xff]
        %v413 = vld [vmem:[%s358 + $0x8] sm:$0xff]
        %v414 = vld [vmem:[%s358 + $0x10] sm:$0xff]
        %v415 = vld [vmem:[%s358 + $0x18] sm:$0xff]
        %v416 = vld [vmem:[#allocation5] sm:$0xf]
        %v417 = vld [vmem:[#allocation5 + $0x4] sm:$0xf]
        %v418 = vld [vmem:[#allocation5 + $0x8] sm:$0xf]
        %v419 = vld [vmem:[#allocation5 + $0xc] sm:$0xf]
        %v420 = vld [vmem:[#allocation5 + $0x10] sm:$0xf]
        %v421 = vld [vmem:[#allocation5 + $0x14] sm:$0xf]
        %v422 = vld [vmem:[#allocation5 + $0x18] sm:$0xf]
        %v423 = vld [vmem:[#allocation5 + $0x1c] sm:$0xf]
        %v424 = vld [vmem:[#allocation5 + $0x20] sm:$0xf]
        %v425 = vld [vmem:[#allocation5 + $0x24] sm:$0xf]
        %v426 = vld [vmem:[#allocation5 + $0x28] sm:$0xf]
        %v427 = vld [vmem:[#allocation5 + $0x2c] sm:$0xf]
        %v428 = vld [vmem:[#allocation5 + $0x30] sm:$0xf]
        %v429 = vld [vmem:[#allocation5 + $0x34] sm:$0xf]
        %v430 = vld [vmem:[#allocation5 + $0x38] sm:$0xf]
        %v431 = vld [vmem:[#allocation5 + $0x3c] sm:$0xf]
        %v432 = vld [vmem:[%s2] sm:$0x1]
        %v433 = vpack.c.bf16 %v413, %v412
        %v434 = vpack.c.bf16 %v415, %v414
        %v436 = vlaneseq
        %v437 = vshrl.u32 %v436, 7
        %v438 = vsub.s32 0, %v437
        %v439 = vrot.slane %v432, %v438
        %v457 = vunpack.c.l.b16 %v416
        %v458 = vunpack.c.l.b16 %v417
        %v459 = vunpack.c.l.b16 %v418
        %v460 = vunpack.c.l.b16 %v419
        %v461 = vunpack.c.l.b16 %v420
        %v462 = vunpack.c.l.b16 %v421
        %v463 = vunpack.c.l.b16 %v422
        %v464 = vunpack.c.l.b16 %v423
        %v465 = vunpack.c.l.b16 %v424
        %v466 = vunpack.c.l.b16 %v425
        %v467 = vunpack.c.l.b16 %v426
        %v468 = vunpack.c.l.b16 %v427
        %v469 = vunpack.c.l.b16 %v428
        %v470 = vunpack.c.l.b16 %v429
        %v471 = vunpack.c.l.b16 %v430
        %v472 = vunpack.c.l.b16 %v431
        %v473 = vpack.c.b16 %v458, %v457
        %v474 = vpack.c.b16 %v460, %v459
        %v475 = vpack.c.b16 %v462, %v461
        %v476 = vpack.c.b16 %v464, %v463
        %v477 = vpack.c.b16 %v466, %v465
        %v478 = vpack.c.b16 %v468, %v467
        %v479 = vpack.c.b16 %v470, %v469
        %v480 = vpack.c.b16 %v472, %v471
        %489 = vmatprep.subr.bf16.mxu0 0
        %490 = vmatpush1.bf16.msra.mxu0 %v480
        %491 = vmatprep.subr.bf16.mxu0 0
        %492 = vmatpush1.bf16.msra.mxu0 %v479
        %493 = vmatprep.subr.bf16.mxu0 0
        %494 = vmatpush1.bf16.msra.mxu0 %v478
        %495 = vmatprep.subr.bf16.mxu0 0
        %496 = vmatpush1.bf16.msra.mxu0 %v477
        %497 = vmatprep.subr.bf16.mxu0 0
        %498 = vmatpush1.bf16.msra.mxu0 %v476
        %499 = vmatprep.subr.bf16.mxu0 0
        %500 = vmatpush1.bf16.msra.mxu0 %v475
        %501 = vmatprep.subr.bf16.mxu0 0
        %502 = vmatpush1.bf16.msra.mxu0 %v474
        %503 = vmatprep.subr.bf16.mxu0 0
        %504 = vmatpush1.bf16.msra.mxu0 %v473
        %505 = vmatprep.subr.bf16.mxu0 0
        %506 = vmatpush2.bf16.msra.mxu0 0
        %507 = vmatprep.subr.bf16.mxu0 0
        %508 = vmatpush2.bf16.msra.mxu0 0
        %509 = vmatprep.subr.bf16.mxu0 0
        %510 = vmatpush2.bf16.msra.mxu0 0
        %511 = vmatprep.subr.bf16.mxu0 0
        %512 = vmatpush2.bf16.msra.mxu0 0
        %513 = vmatprep.subr.bf16.mxu0 0
        %514 = vmatpush2.bf16.msra.mxu0 0
        %515 = vmatprep.subr.bf16.mxu0 0
        %516 = vmatpush2.bf16.msra.mxu0 0
        %517 = vmatprep.subr.bf16.mxu0 0
        %518 = vmatpush2.bf16.msra.mxu0 0
        %519 = vmatprep.subr.bf16.mxu0 0
        %520 = vmatpush2.bf16.msra.mxu0 0
        %521 = vmatprep.mubr.bf16.mxu0 0
        %522 = vmatmul.mubr.bf16.gmra.mxu0 %v433
        %v523 = vpop.f32.mrf.mxu0
        %v524 = vadd.f32 %v439, %v523
        %v525 = vpop.f32.mrf.mxu0
        %v526 = vpop.f32.mrf.mxu0
        %v527 = vadd.f32 %v439, %v526
        %v528 = vpop.f32.mrf.mxu0
        %529 = vmatprep.mubr.bf16.mxu0 0
        %530 = vmatmul.mubr.bf16.gmra.mxu0 %v434
        %v531 = vpop.f32.mrf.mxu0
        %v532 = vadd.f32 %v439, %v531
        %v533 = vpop.f32.mrf.mxu0
        %v534 = vpop.f32.mrf.mxu0
        %v535 = vadd.f32 %v439, %v534
        %v536 = vpop.f32.mrf.mxu0
        %537 = vdwg.mxu0
        %vm538 = vcmp.gt.f32.partialorder %v524, 0.0
        %vm539 = vcmp.gt.f32.partialorder %v527, 0.0
        %vm540 = vcmp.gt.f32.partialorder %v532, 0.0
        %vm541 = vcmp.gt.f32.partialorder %v535, 0.0
        %v542 = vmul.f32 %v524, 0.01
        %v543 = vmul.f32 %v527, 0.01
        %v544 = vmul.f32 %v532, 0.01
        %v545 = vmul.f32 %v535, 0.01
        %v546 = vsel %vm538, %v524, %v542
        %v547 = vsel %vm539, %v527, %v543
        %v548 = vsel %vm540, %v532, %v544
        %v549 = vsel %vm541, %v535, %v545
        %v550 = vld [vmem:[#allocation7] sm:$0xf]
        %v551 = vld [vmem:[#allocation7 + $0x4] sm:$0xf]
        %v552 = vld [vmem:[#allocation7 + $0x8] sm:$0xf]
        %v553 = vld [vmem:[#allocation7 + $0xc] sm:$0xf]
        %v554 = vld [vmem:[#allocation7 + $0x10] sm:$0xf]
        %v555 = vld [vmem:[#allocation7 + $0x14] sm:$0xf]
        %v556 = vld [vmem:[#allocation7 + $0x18] sm:$0xf]
        %v557 = vld [vmem:[#allocation7 + $0x1c] sm:$0xf]
        %v558 = vld [vmem:[#allocation7 + $0x20] sm:$0xf]
        %v559 = vld [vmem:[#allocation7 + $0x24] sm:$0xf]
        %v560 = vld [vmem:[#allocation7 + $0x28] sm:$0xf]
        %v561 = vld [vmem:[#allocation7 + $0x2c] sm:$0xf]
        %v562 = vld [vmem:[#allocation7 + $0x30] sm:$0xf]
        %v563 = vld [vmem:[#allocation7 + $0x34] sm:$0xf]
        %v564 = vld [vmem:[#allocation7 + $0x38] sm:$0xf]
        %v565 = vld [vmem:[#allocation7 + $0x3c] sm:$0xf]
        %v566 = vld [vmem:[%s4] sm:$0x1]
        %v567 = vpack.c.bf16 %v547, %v546
        %v568 = vpack.c.bf16 %v549, %v548
        %v570 = vlaneseq
        %v571 = vshrl.u32 %v570, 7
        %v572 = vsub.s32 0, %v571
        %v573 = vrot.slane %v566, %v572
        %v591 = vunpack.c.l.b16 %v550
        %v592 = vunpack.c.l.b16 %v551
        %v593 = vunpack.c.l.b16 %v552
        %v594 = vunpack.c.l.b16 %v553
        %v595 = vunpack.c.l.b16 %v554
        %v596 = vunpack.c.l.b16 %v555
        %v597 = vunpack.c.l.b16 %v556
        %v598 = vunpack.c.l.b16 %v557
        %v599 = vunpack.c.l.b16 %v558
        %v600 = vunpack.c.l.b16 %v559
        %v601 = vunpack.c.l.b16 %v560
        %v602 = vunpack.c.l.b16 %v561
        %v603 = vunpack.c.l.b16 %v562
        %v604 = vunpack.c.l.b16 %v563
        %v605 = vunpack.c.l.b16 %v564
        %v606 = vunpack.c.l.b16 %v565
        %v607 = vpack.c.b16 %v592, %v591
        %v608 = vpack.c.b16 %v594, %v593
        %v609 = vpack.c.b16 %v596, %v595
        %v610 = vpack.c.b16 %v598, %v597
        %v611 = vpack.c.b16 %v600, %v599
        %v612 = vpack.c.b16 %v602, %v601
        %v613 = vpack.c.b16 %v604, %v603
        %v614 = vpack.c.b16 %v606, %v605
        %623 = vmatprep.subr.bf16.mxu0 0
        %624 = vmatpush1.bf16.msra.mxu0 %v614
        %625 = vmatprep.subr.bf16.mxu0 0
        %626 = vmatpush1.bf16.msra.mxu0 %v613
        %627 = vmatprep.subr.bf16.mxu0 0
        %628 = vmatpush1.bf16.msra.mxu0 %v612
        %629 = vmatprep.subr.bf16.mxu0 0
        %630 = vmatpush1.bf16.msra.mxu0 %v611
        %631 = vmatprep.subr.bf16.mxu0 0
        %632 = vmatpush1.bf16.msra.mxu0 %v610
        %633 = vmatprep.subr.bf16.mxu0 0
        %634 = vmatpush1.bf16.msra.mxu0 %v609
        %635 = vmatprep.subr.bf16.mxu0 0
        %636 = vmatpush1.bf16.msra.mxu0 %v608
        %637 = vmatprep.subr.bf16.mxu0 0
        %638 = vmatpush1.bf16.msra.mxu0 %v607
        %639 = vmatprep.subr.bf16.mxu0 0
        %640 = vmatpush2.bf16.msra.mxu0 0
        %641 = vmatprep.subr.bf16.mxu0 0
        %642 = vmatpush2.bf16.msra.mxu0 0
        %643 = vmatprep.subr.bf16.mxu0 0
        %644 = vmatpush2.bf16.msra.mxu0 0
        %645 = vmatprep.subr.bf16.mxu0 0
        %646 = vmatpush2.bf16.msra.mxu0 0
        %647 = vmatprep.subr.bf16.mxu0 0
        %648 = vmatpush2.bf16.msra.mxu0 0
        %649 = vmatprep.subr.bf16.mxu0 0
        %650 = vmatpush2.bf16.msra.mxu0 0
        %651 = vmatprep.subr.bf16.mxu0 0
        %652 = vmatpush2.bf16.msra.mxu0 0
        %653 = vmatprep.subr.bf16.mxu0 0
        %654 = vmatpush2.bf16.msra.mxu0 0
        %655 = vmatprep.mubr.bf16.mxu0 0
        %656 = vmatmul.mubr.bf16.gmra.mxu0 %v567
        %v657 = vpop.f32.mrf.mxu0
        %v658 = vadd.f32 %v573, %v657
        %v659 = vpop.f32.mrf.mxu0
        %v660 = vpop.f32.mrf.mxu0
        %v661 = vadd.f32 %v573, %v660
        %v662 = vpop.f32.mrf.mxu0
        %663 = vmatprep.mubr.bf16.mxu0 0
        %664 = vmatmul.mubr.bf16.gmra.mxu0 %v568
        %v665 = vpop.f32.mrf.mxu0
        %v666 = vadd.f32 %v573, %v665
        %v667 = vpop.f32.mrf.mxu0
        %v668 = vpop.f32.mrf.mxu0
        %v669 = vadd.f32 %v573, %v668
        %v670 = vpop.f32.mrf.mxu0
        %671 = vdwg.mxu0
        %vm672 = vcmp.gt.f32.partialorder %v658, 0.0
        %vm673 = vcmp.gt.f32.partialorder %v661, 0.0
        %vm674 = vcmp.gt.f32.partialorder %v666, 0.0
        %vm675 = vcmp.gt.f32.partialorder %v669, 0.0
        %v676 = vmul.f32 %v658, 0.01
        %v677 = vmul.f32 %v661, 0.01
        %v678 = vmul.f32 %v666, 0.01
        %v679 = vmul.f32 %v669, 0.01
        %v680 = vsel %vm672, %v658, %v676
        %v681 = vsel %vm673, %v661, %v677
        %v682 = vsel %vm674, %v666, %v678
        %v683 = vsel %vm675, %v669, %v679
        %v684 = vld [vmem:[#allocation8] sm:$0xf]
        %v685 = vld [vmem:[#allocation8 + $0x4] sm:$0xf]
        %v686 = vld [vmem:[#allocation8 + $0x8] sm:$0xf]
        %v687 = vld [vmem:[#allocation8 + $0xc] sm:$0xf]
        %v688 = vld [vmem:[#allocation8 + $0x10] sm:$0xf]
        %v689 = vld [vmem:[#allocation8 + $0x14] sm:$0xf]
        %v690 = vld [vmem:[#allocation8 + $0x18] sm:$0xf]
        %v691 = vld [vmem:[#allocation8 + $0x1c] sm:$0xf]
        %v692 = vld [vmem:[#allocation8 + $0x20] sm:$0xf]
        %v693 = vld [vmem:[#allocation8 + $0x24] sm:$0xf]
        %v694 = vld [vmem:[#allocation8 + $0x28] sm:$0xf]
        %v695 = vld [vmem:[#allocation8 + $0x2c] sm:$0xf]
        %v696 = vld [vmem:[#allocation8 + $0x30] sm:$0xf]
        %v697 = vld [vmem:[#allocation8 + $0x34] sm:$0xf]
        %v698 = vld [vmem:[#allocation8 + $0x38] sm:$0xf]
        %v699 = vld [vmem:[#allocation8 + $0x3c] sm:$0xf]
        %v700 = vld [vmem:[%s6] sm:$0x1]
        %v701 = vpack.c.bf16 %v681, %v680
        %v702 = vpack.c.bf16 %v683, %v682
        %v704 = vlaneseq
        %v705 = vshrl.u32 %v704, 7
        %v706 = vsub.s32 0, %v705
        %v707 = vrot.slane %v700, %v706
        %v725 = vunpack.c.l.b16 %v684
        %v726 = vunpack.c.l.b16 %v685
        %v727 = vunpack.c.l.b16 %v686
        %v728 = vunpack.c.l.b16 %v687
        %v729 = vunpack.c.l.b16 %v688
        %v730 = vunpack.c.l.b16 %v689
        %v731 = vunpack.c.l.b16 %v690
        %v732 = vunpack.c.l.b16 %v691
        %v733 = vunpack.c.l.b16 %v692
        %v734 = vunpack.c.l.b16 %v693
        %v735 = vunpack.c.l.b16 %v694
        %v736 = vunpack.c.l.b16 %v695
        %v737 = vunpack.c.l.b16 %v696
        %v738 = vunpack.c.l.b16 %v697
        %v739 = vunpack.c.l.b16 %v698
        %v740 = vunpack.c.l.b16 %v699
        %v741 = vpack.c.b16 %v726, %v725
        %v742 = vpack.c.b16 %v728, %v727
        %v743 = vpack.c.b16 %v730, %v729
        %v744 = vpack.c.b16 %v732, %v731
        %v745 = vpack.c.b16 %v734, %v733
        %v746 = vpack.c.b16 %v736, %v735
        %v747 = vpack.c.b16 %v738, %v737
        %v748 = vpack.c.b16 %v740, %v739
        %757 = vmatprep.subr.bf16.mxu0 0
        %758 = vmatpush1.bf16.msra.mxu0 %v748
        %759 = vmatprep.subr.bf16.mxu0 0
        %760 = vmatpush1.bf16.msra.mxu0 %v747
        %761 = vmatprep.subr.bf16.mxu0 0
        %762 = vmatpush1.bf16.msra.mxu0 %v746
        %763 = vmatprep.subr.bf16.mxu0 0
        %764 = vmatpush1.bf16.msra.mxu0 %v745
        %765 = vmatprep.subr.bf16.mxu0 0
        %766 = vmatpush1.bf16.msra.mxu0 %v744
        %767 = vmatprep.subr.bf16.mxu0 0
        %768 = vmatpush1.bf16.msra.mxu0 %v743
        %769 = vmatprep.subr.bf16.mxu0 0
        %770 = vmatpush1.bf16.msra.mxu0 %v742
        %771 = vmatprep.subr.bf16.mxu0 0
        %772 = vmatpush1.bf16.msra.mxu0 %v741
        %773 = vmatprep.subr.bf16.mxu0 0
        %774 = vmatpush2.bf16.msra.mxu0 0
        %775 = vmatprep.subr.bf16.mxu0 0
        %776 = vmatpush2.bf16.msra.mxu0 0
        %777 = vmatprep.subr.bf16.mxu0 0
        %778 = vmatpush2.bf16.msra.mxu0 0
        %779 = vmatprep.subr.bf16.mxu0 0
        %780 = vmatpush2.bf16.msra.mxu0 0
        %781 = vmatprep.subr.bf16.mxu0 0
        %782 = vmatpush2.bf16.msra.mxu0 0
        %783 = vmatprep.subr.bf16.mxu0 0
        %784 = vmatpush2.bf16.msra.mxu0 0
        %785 = vmatprep.subr.bf16.mxu0 0
        %786 = vmatpush2.bf16.msra.mxu0 0
        %787 = vmatprep.subr.bf16.mxu0 0
        %788 = vmatpush2.bf16.msra.mxu0 0
        %789 = vmatprep.mubr.bf16.mxu0 0
        %790 = vmatmul.mubr.bf16.gmra.mxu0 %v701
        %v791 = vpop.f32.mrf.mxu0
        %v792 = vadd.f32 %v707, %v791
        %v793 = vpop.f32.mrf.mxu0
        %v794 = vpop.f32.mrf.mxu0
        %v795 = vadd.f32 %v707, %v794
        %v796 = vpop.f32.mrf.mxu0
        %797 = vmatprep.mubr.bf16.mxu0 0
        %798 = vmatmul.mubr.bf16.gmra.mxu0 %v702
        %v799 = vpop.f32.mrf.mxu0
        %v800 = vadd.f32 %v707, %v799
        %v801 = vpop.f32.mrf.mxu0
        %v802 = vpop.f32.mrf.mxu0
        %v803 = vadd.f32 %v707, %v802
        %v804 = vpop.f32.mrf.mxu0
        %805 = vdwg.mxu0
        %vm806 = vcmp.gt.f32.partialorder %v792, 0.0
        %vm807 = vcmp.gt.f32.partialorder %v795, 0.0
        %vm808 = vcmp.gt.f32.partialorder %v800, 0.0
        %vm809 = vcmp.gt.f32.partialorder %v803, 0.0
        %v810 = vmul.f32 %v792, 0.01
        %v811 = vmul.f32 %v795, 0.01
        %v812 = vmul.f32 %v800, 0.01
        %v813 = vmul.f32 %v803, 0.01
        %v814 = vsel %vm806, %v792, %v810
        %v815 = vsel %vm807, %v795, %v811
        %v816 = vsel %vm808, %v800, %v812
        %v817 = vsel %vm809, %v803, %v813
        %v818 = vld [vmem:[#allocation10] sm:$0xf]
        %v819 = vld [vmem:[#allocation10 + $0x4] sm:$0xf]
        %v820 = vld [vmem:[#allocation10 + $0x8] sm:$0xf]
        %v821 = vld [vmem:[#allocation10 + $0xc] sm:$0xf]
        %v822 = vld [vmem:[#allocation10 + $0x10] sm:$0xf]
        %v823 = vld [vmem:[#allocation10 + $0x14] sm:$0xf]
        %v824 = vld [vmem:[#allocation10 + $0x18] sm:$0xf]
        %v825 = vld [vmem:[#allocation10 + $0x1c] sm:$0xf]
        %v826 = vld [vmem:[#allocation10 + $0x20] sm:$0xf]
        %v827 = vld [vmem:[#allocation10 + $0x24] sm:$0xf]
        %v828 = vld [vmem:[#allocation10 + $0x28] sm:$0xf]
        %v829 = vld [vmem:[#allocation10 + $0x2c] sm:$0xf]
        %v830 = vld [vmem:[#allocation10 + $0x30] sm:$0xf]
        %v831 = vld [vmem:[#allocation10 + $0x34] sm:$0xf]
        %v832 = vld [vmem:[#allocation10 + $0x38] sm:$0xf]
        %v833 = vld [vmem:[#allocation10 + $0x3c] sm:$0xf]
        %v834 = vld [vmem:[%s8] sm:$0x1]
        %v835 = vpack.c.bf16 %v815, %v814
        %v836 = vpack.c.bf16 %v817, %v816
        %v838 = vlaneseq
        %v839 = vshrl.u32 %v838, 7
        %v840 = vsub.s32 0, %v839
        %v841 = vrot.slane %v834, %v840
        %v859 = vunpack.c.l.b16 %v818
        %v860 = vunpack.c.l.b16 %v819
        %v861 = vunpack.c.l.b16 %v820
        %v862 = vunpack.c.l.b16 %v821
        %v863 = vunpack.c.l.b16 %v822
        %v864 = vunpack.c.l.b16 %v823
        %v865 = vunpack.c.l.b16 %v824
        %v866 = vunpack.c.l.b16 %v825
        %v867 = vunpack.c.l.b16 %v826
        %v868 = vunpack.c.l.b16 %v827
        %v869 = vunpack.c.l.b16 %v828
        %v870 = vunpack.c.l.b16 %v829
        %v871 = vunpack.c.l.b16 %v830
        %v872 = vunpack.c.l.b16 %v831
        %v873 = vunpack.c.l.b16 %v832
        %v874 = vunpack.c.l.b16 %v833
        %v875 = vpack.c.b16 %v860, %v859
        %v876 = vpack.c.b16 %v862, %v861
        %v877 = vpack.c.b16 %v864, %v863
        %v878 = vpack.c.b16 %v866, %v865
        %v879 = vpack.c.b16 %v868, %v867
        %v880 = vpack.c.b16 %v870, %v869
        %v881 = vpack.c.b16 %v872, %v871
        %v882 = vpack.c.b16 %v874, %v873
        %891 = vmatprep.subr.bf16.mxu0 0
        %892 = vmatpush1.bf16.msra.mxu0 %v882
        %893 = vmatprep.subr.bf16.mxu0 0
        %894 = vmatpush1.bf16.msra.mxu0 %v881
        %895 = vmatprep.subr.bf16.mxu0 0
        %896 = vmatpush1.bf16.msra.mxu0 %v880
        %897 = vmatprep.subr.bf16.mxu0 0
        %898 = vmatpush1.bf16.msra.mxu0 %v879
        %899 = vmatprep.subr.bf16.mxu0 0
        %900 = vmatpush1.bf16.msra.mxu0 %v878
        %901 = vmatprep.subr.bf16.mxu0 0
        %902 = vmatpush1.bf16.msra.mxu0 %v877
        %903 = vmatprep.subr.bf16.mxu0 0
        %904 = vmatpush1.bf16.msra.mxu0 %v876
        %905 = vmatprep.subr.bf16.mxu0 0
        %906 = vmatpush1.bf16.msra.mxu0 %v875
        %907 = vmatprep.subr.bf16.mxu0 0
        %908 = vmatpush2.bf16.msra.mxu0 0
        %909 = vmatprep.subr.bf16.mxu0 0
        %910 = vmatpush2.bf16.msra.mxu0 0
        %911 = vmatprep.subr.bf16.mxu0 0
        %912 = vmatpush2.bf16.msra.mxu0 0
        %913 = vmatprep.subr.bf16.mxu0 0
        %914 = vmatpush2.bf16.msra.mxu0 0
        %915 = vmatprep.subr.bf16.mxu0 0
        %916 = vmatpush2.bf16.msra.mxu0 0
        %917 = vmatprep.subr.bf16.mxu0 0
        %918 = vmatpush2.bf16.msra.mxu0 0
        %919 = vmatprep.subr.bf16.mxu0 0
        %920 = vmatpush2.bf16.msra.mxu0 0
        %921 = vmatprep.subr.bf16.mxu0 0
        %922 = vmatpush2.bf16.msra.mxu0 0
        %923 = vmatprep.mubr.bf16.mxu0 0
        %924 = vmatmul.mubr.bf16.gmra.mxu0 %v835
        %v925 = vpop.f32.mrf.mxu0
        %v926 = vadd.f32 %v841, %v925
        %v927 = vpop.f32.mrf.mxu0
        %v928 = vpop.f32.mrf.mxu0
        %v929 = vadd.f32 %v841, %v928
        %v930 = vpop.f32.mrf.mxu0
        %931 = vmatprep.mubr.bf16.mxu0 0
        %932 = vmatmul.mubr.bf16.gmra.mxu0 %v836
        %v933 = vpop.f32.mrf.mxu0
        %v934 = vadd.f32 %v841, %v933
        %v935 = vpop.f32.mrf.mxu0
        %v936 = vpop.f32.mrf.mxu0
        %v937 = vadd.f32 %v841, %v936
        %v938 = vpop.f32.mrf.mxu0
        %939 = vdwg.mxu0
        %940 = vst [vmem:[%s408] sm:$0xff] %v926
        %941 = vst [vmem:[%s408 + $0x8] sm:$0xff] %v929
        %942 = vst [vmem:[%s408 + $0x10] sm:$0xff] %v934
        %943 = vst [vmem:[%s408 + $0x18] sm:$0xff] %v937
        %s944 = sand.u32 %s230, 1
        %s945 = scalar_lea.sflag [#allocation4], %s944
        %s946 = sand.u32 %s230, 1
        %s947 = smul.addr %s946, 32
        %s948 = scalar_lea.vmem [#allocation11], %s947
        // Predicated region
        $region77: #{tpu_custom_call.1} parent=55 // pred_check
          %p949 = pneg %p240
        $region78: #{tpu_custom_call.1} parent=55 // pred_check_branch
          %951 = sbr.rel (%p949) target = $region80
        $region79: #{tpu_custom_call.1} parent=55 // pred_region
          %s952 = smul.u32 4, %s28
          %s954 = ssub.s32 512, 512
          %955 = vsyncadd %s945, %s954
          %s956 = smul.addr %s952, 128
          %s957 = scalar_lea.hbm %s9, %s956
          %s958 = sshll.u32 %s948, 4
          %s959 = int_to_ptr.vmem [resolvable:$true] %s958
          %964 = dma.vmem_to_hbm [thread:$0]  %s959, 512, %s957, %s945, 128, 128, 8
        $region80: #{tpu_custom_call.1} parent=55 // pred_fallthru
          _
      $region56: #{tpu_custom_call.1} parent=5 // pred_fallthru
        _
      %p965 = scmp.le.s32.totalorder 2, %s23
      // Predicated region
      $region81: #{tpu_custom_call.1} parent=5 // pred_check
        %p966 = pneg %p965
      $region82: #{tpu_custom_call.1} parent=5 // pred_check_branch
        %968 = sbr.rel (%p966) target = $region84
      $region83: #{tpu_custom_call.1} parent=5 // pred_region
        %s969 = ssub.s32 %s23, 2
        // Predicated region
        $region85: #{tpu_custom_call.1} parent=83 // pred_check
          %p970 = pneg %p246
        $region86: #{tpu_custom_call.1} parent=83 // pred_check_branch
          %972 = sbr.rel (%p970) target = $region88
        $region87: #{tpu_custom_call.1} parent=83 // pred_region
          %s973 = sand.u32 %s231, 1
          %s974 = scalar_lea.sflag [#allocation4], %s973
          %s975 = sand.u32 %s231, 1
          %s976 = smul.addr %s975, 32
          %s977 = scalar_lea.vmem [#allocation11], %s976
          %978 = dma.done %s974, 512
        $region88: #{tpu_custom_call.1} parent=83 // pred_fallthru
          _
      $region84: #{tpu_custom_call.1} parent=5 // pred_fallthru
        _
    $region6: #{tpu_custom_call.1} parent=1 // loop_footer
      %s27 = sadd.s32 1, %s23
    $region7: #{tpu_custom_call.1} parent=1 // loop_footer_branch
      %22 = sbr.rel target = $region3
    $region8: #{tpu_custom_call.1} parent=1 // loop_exit
      _
    %979 = vsyncpa [#allocation3], 1
    %s980 = scalar_lea.sflag [#allocation3], 1
    %981 = vsyncpa %s980, 1
    %982 = vsyncpa [#allocation6], 1
    %983 = vsyncpa [#allocation9], 1
    %984 = vsyncpa [#allocation4], 1
    %s985 = scalar_lea.sflag [#allocation4], 1
    %986 = vsyncpa %s985, 1

</llo_original>
